<compile_context>
chip_gen: v5e
topology: v5e:2x2
jax: 0.10.0
libtpu: 0.0.40
codegen_flags: <defaults>
</compile_context>

<pallas_src>
import numpy as np
import jax
import jax.numpy as jnp
from jax.experimental import pallas as pl
from jax.experimental.pallas import tpu as pltpu


def _cbam_kernel(x_ref, w1_ref, w2_ref, cm_ref, out_ref):
    # x_ref : (Bt, C, HW)   lane-dense block of batch elements
    # w1_ref: (Cr, C)       Conv2d(C, C//r, 1, bias=False) weight
    # w2_ref: (C, Cr)       Conv2d(C//r, C, 1, bias=False) weight
    # cm_ref: (2*HW, HW)    stacked [mean; max] conv+replicate-pad band matrices (bf16)
    x = x_ref[...].astype(jnp.float32)                   # (Bt, C, HW)
    w1 = w1_ref[...].astype(jnp.float32)                 # (Cr, C)
    w2 = w2_ref[...].astype(jnp.float32)                 # (C, Cr)
    Bt = x.shape[0]

    # ---- channel attention -------------------------------------------------
    avg = jnp.mean(x, axis=2)                            # (Bt, C)
    mx = jnp.max(x, axis=2)                              # (Bt, C)
    stat = jnp.concatenate([avg, mx], axis=0)            # (2*Bt, C): rows [avg | max]
    # One matmul per MLP layer for the whole block (contract on C / Cr).
    h = jax.lax.dot_general(stat, w1, (((1,), (1,)), ((), ())),
                            preferred_element_type=jnp.float32)      # (2*Bt, Cr)
    h = jnp.maximum(h, 0.0)
    o = jax.lax.dot_general(h, w2, (((1,), (1,)), ((), ())),
                            preferred_element_type=jnp.float32)      # (2*Bt, C)
    ca = jax.nn.sigmoid(o[:Bt] + o[Bt:])                 # (Bt, C) == sigmoid(fc(avg)+fc(max))

    xca = x * ca[:, :, None]                             # channel-gated x, (Bt, C, HW)

    # ---- spatial attention (fused, no HBM round trip) ----------------------
    s_mean = jnp.mean(xca, axis=1)                       # (Bt, HW)
    s_max = jnp.max(xca, axis=1)                         # (Bt, HW)
    # 7x7 conv with replicate padding == ONE matmul against the stacked
    # (2*HW, HW) band matrix.  Matmul operands in bf16, accumulate in f32.
    lhs = jnp.concatenate([s_mean, s_max], axis=1).astype(jnp.bfloat16)   # (Bt, 2*HW)
    logit = jnp.dot(lhs, cm_ref[...], preferred_element_type=jnp.float32)  # (Bt, HW)
    attn = jax.nn.sigmoid(logit)                         # (Bt, HW)

    out_ref[...] = (xca * attn[:, None, :]).astype(out_ref.dtype)   # lane-dense store


def _conv_as_matrix(wconv, H, W, dtype=jnp.bfloat16):
    """Fold Conv2d(2, 1, K, padding=K//2, padding_mode='replicate', bias=False)
    into one stacked (2*H*W, H*W) band matrix.  Host-side numpy, done once."""
    wc = np.asarray(wconv, np.float32)                   # (2, K, K)
    K = wc.shape[-1]
    P = K // 2
    HW = H * W
    cm = np.zeros((2, HW, HW), np.float32)
    ii, jj = np.meshgrid(np.arange(H), np.arange(W), indexing="ij")
    out_flat = (ii * W + jj).reshape(-1)                 # (HW,)
    for ki in range(K):
        for kj in range(K):
            si = np.clip(ii + (ki - P), 0, H - 1)        # replicate padding == clamp
            sj = np.clip(jj + (kj - P), 0, W - 1)
            src = (si * W + sj).reshape(-1)              # source flat index per output
            np.add.at(cm[0], (src, out_flat), wc[0, ki, kj])
            np.add.at(cm[1], (src, out_flat), wc[1, ki, kj])
    # Stack the two per-channel matrices along the contraction axis:
    # rows [0:HW] multiply s_mean, rows [HW:2*HW] multiply s_max.
    return jnp.asarray(cm.reshape(2 * HW, HW), dtype)


def _pick_bt(B, max_bt=8):
    for bt in range(min(B, max_bt), 0, -1):
        if B % bt == 0:
            return bt
    return 1


def cbam_forward(x, w1, w2, wconv):
    B, C, H, W = x.shape
    Cr = w1.shape[0]
    HW = H * W
    Bt = _pick_bt(B)
    nb = B // Bt

    x2 = x.reshape(B, C, HW)                             # lane-dense view (free reshape)
    cm = _conv_as_matrix(wconv, H, W)                    # (2*HW, HW) bf16, built once on host

    cost = pl.CostEstimate(
        flops=2 * B * (2 * HW) * HW                      # spatial band matmul
        + 2 * (2 * B) * C * Cr * 2                       # channel MLP (two layers)
        + 6 * B * C * HW,                                # pooling + elementwise scales
        transcendentals=2 * B * (C + HW),                # sigmoids
        bytes_accessed=2 * B * C * HW * x.dtype.itemsize # x in + out
        + cm.size * cm.dtype.itemsize + (w1.size + w2.size) * 4,
    )

    out2 = pl.pallas_call(
        _cbam_kernel,
        grid=(nb,),
        in_specs=[
            pl.BlockSpec((Bt, C, HW), lambda b: (b, 0, 0)),
            pl.BlockSpec((Cr, C), lambda b: (0, 0)),
            pl.BlockSpec((C, Cr), lambda b: (0, 0)),
            pl.BlockSpec((2 * HW, HW), lambda b: (0, 0)),     # resident across steps
        ],
        out_specs=pl.BlockSpec((Bt, C, HW), lambda b: (b, 0, 0)),
        out_shape=jax.ShapeDtypeStruct((B, C, HW), x.dtype),
        cost_estimate=cost,
        compiler_params=pltpu.CompilerParams(
            dimension_semantics=("parallel",)),          # megacore shards batch blocks
    )(x2, w1, w2, cm)

    return out2.reshape(B, C, H, W)


def cbam_reference(x, w1, w2, wconv, kernel_size=7):
    # pure-JAX reference mirroring the PyTorch forward (all f32)
    avg = jnp.mean(x, axis=(2, 3))                       # (B, C)
    mx = jnp.max(x, axis=(2, 3))

    def fc(v):
        h = jax.nn.relu(v @ w1.T)                        # (B, Cr)
        return h @ w2.T                                  # (B, C)

    ca = jax.nn.sigmoid(fc(avg) + fc(mx))
    xca = x * ca[:, :, None, None]

    s_avg = jnp.mean(xca, axis=1, keepdims=True)
    s_max = jnp.max(xca, axis=1, keepdims=True)
    sm = jnp.concatenate([s_avg, s_max], axis=1)         # (B, 2, H, W)
    P = kernel_size // 2
    smp = jnp.pad(sm, ((0, 0), (0, 0), (P, P), (P, P)), mode="edge")
    conv = jax.lax.conv_general_dilated(
        smp, wconv[None], (1, 1), "VALID",
        dimension_numbers=("NCHW", "OIHW", "NCHW"))      # (B, 1, H, W)
    return xca * jax.nn.sigmoid(conv)


if __name__ == "__main__":
    key = jax.random.PRNGKey(0)
    k1, k2, k3, k4 = jax.random.split(key, 4)

    B, C, H, W = 2, 8, 16, 16
    ratio = 4
    Cr = C // ratio

    x = jax.random.normal(k1, (B, C, H, W), jnp.float32)
    # Conv2d(C, C//ratio, 1, bias=False) -> (Cr, C); Conv2d(C//ratio, C, 1) -> (C, Cr)
    w1 = jax.random.normal(k2, (Cr, C), jnp.float32) * 0.5
    w2 = jax.random.normal(k3, (C, Cr), jnp.float32) * 0.5
    # Conv2d(2, 1, 7, bias=False) weight (1, 2, 7, 7), stored squeezed as (2, 7, 7)
    wconv = jax.random.normal(k4, (2, 7, 7), jnp.float32) * 0.1

    out = cbam_forward(x, w1, w2, wconv)
    out = jax.block_until_ready(out)

    ref = cbam_reference(x, w1, w2, wconv)
    max_err = float(jnp.max(jnp.abs(out - ref)))
    # bf16 spatial-conv operands -> slightly looser tolerance than pure-f32.
    assert jnp.allclose(out, ref, atol=1.5e-2, rtol=1.5e-2), f"max_err={max_err}"

    print("KERNEL_OK")
</pallas_src>

<mosaic_0001>
module attributes {stable_mosaic.version = 11 : i64} {
  func.func @_cbam_kernel(%arg0: i32, %arg1: memref<2x8x256xf32, #tpu.memory_space<vmem>>, %arg2: memref<2x8xf32, #tpu.memory_space<vmem>>, %arg3: memref<8x2xf32, #tpu.memory_space<vmem>>, %arg4: memref<512x256xbf16, #tpu.memory_space<vmem>>, %arg5: memref<2x8x256xf32, #tpu.memory_space<vmem>>) attributes {dimension_semantics = [#tpu.dimension_semantics<parallel>], iteration_bounds = array<i64: 1>, scalar_prefetch = 0 : i64, scratch_operands = 0 : i64, tpu.core_type = #tpu.core_type<tc>, window_params = [{transform_indices = @transform_0, window_bounds = array<i64: 2, 8, 256>}, {pipeline_mode = #tpu.pipeline_mode<synchronous>, transform_indices = @transform_1, window_bounds = array<i64: 2, 8>}, {pipeline_mode = #tpu.pipeline_mode<synchronous>, transform_indices = @transform_2, window_bounds = array<i64: 8, 2>}, {pipeline_mode = #tpu.pipeline_mode<synchronous>, transform_indices = @transform_3, window_bounds = array<i64: 512, 256>}, {transform_indices = @transform_4, window_bounds = array<i64: 2, 8, 256>}]} {
    %c0 = arith.constant 0 : index
    %c0_0 = arith.constant 0 : index
    %c0_1 = arith.constant 0 : index
    %0 = vector.load %arg1[%c0, %c0_0, %c0_1] : memref<2x8x256xf32, #tpu.memory_space<vmem>>, vector<2x8x256xf32>
    %c0_2 = arith.constant 0 : index
    %c0_3 = arith.constant 0 : index
    %1 = vector.load %arg2[%c0_2, %c0_3] : memref<2x8xf32, #tpu.memory_space<vmem>>, vector<2x8xf32>
    %c0_4 = arith.constant 0 : index
    %c0_5 = arith.constant 0 : index
    %2 = vector.load %arg3[%c0_4, %c0_5] : memref<8x2xf32, #tpu.memory_space<vmem>>, vector<8x2xf32>
    %cst = arith.constant dense<0.000000e+00> : vector<2x8xf32>
    %3 = vector.multi_reduction <add>, %0, %cst [2] : vector<2x8x256xf32> to vector<2x8xf32>
    %cst_6 = arith.constant 2.560000e+02 : f32
    %4 = vector.broadcast %cst_6 : f32 to vector<2x8xf32>
    %5 = arith.divf %3, %4 : vector<2x8xf32>
    %cst_7 = arith.constant dense<0xFF800000> : vector<2x8xf32>
    %6 = vector.multi_reduction <maximumf>, %0, %cst_7 [2] : vector<2x8x256xf32> to vector<2x8xf32>
    %7 = tpu.concatenate %5, %6 in 0 : vector<2x8xf32>, vector<2x8xf32> -> vector<4x8xf32>
    %cst_8 = arith.constant dense<0.000000e+00> : vector<4x2xf32>
    %8 = tpu.matmul %7, %1, %cst_8 {dimension_numbers = #tpu.dot_dimension_numbers<[1], [1], [0], [0], [0, 0, 1, 0], [], []>} : vector<4x8xf32>, vector<2x8xf32>, vector<4x2xf32> -> vector<4x2xf32>
    %cst_9 = arith.constant 0.000000e+00 : f32
    %9 = vector.broadcast %cst_9 : f32 to vector<4x2xf32>
    %10 = arith.maximumf %8, %9 : vector<4x2xf32>
    %cst_10 = arith.constant dense<0.000000e+00> : vector<4x8xf32>
    %11 = tpu.matmul %10, %2, %cst_10 {dimension_numbers = #tpu.dot_dimension_numbers<[1], [1], [0], [0], [0, 0, 1, 0], [], []>} : vector<4x2xf32>, vector<8x2xf32>, vector<4x8xf32> -> vector<4x8xf32>
    %12 = vector.extract_strided_slice %11 {offsets = [0, 0], sizes = [2, 8], strides = [1, 1]} : vector<4x8xf32> to vector<2x8xf32>
    %13 = vector.extract_strided_slice %11 {offsets = [2, 0], sizes = [2, 8], strides = [1, 1]} : vector<4x8xf32> to vector<2x8xf32>
    %14 = arith.addf %12, %13 : vector<2x8xf32>
    %15 = arith.negf %14 : vector<2x8xf32>
    %16 = math.exp %15 : vector<2x8xf32>
    %cst_11 = arith.constant 1.000000e+00 : f32
    %17 = vector.broadcast %cst_11 : f32 to vector<2x8xf32>
    %18 = arith.addf %17, %16 : vector<2x8xf32>
    %19 = arith.divf %17, %18 : vector<2x8xf32>
    %20 = vector.shape_cast %19 : vector<2x8xf32> to vector<2x8x1xf32>
    %21 = vector.broadcast %20 : vector<2x8x1xf32> to vector<2x8x256xf32>
    %22 = arith.mulf %0, %21 : vector<2x8x256xf32>
    %cst_12 = arith.constant dense<0.000000e+00> : vector<2x256xf32>
    %23 = vector.multi_reduction <add>, %22, %cst_12 [1] : vector<2x8x256xf32> to vector<2x256xf32>
    %cst_13 = arith.constant 8.000000e+00 : f32
    %24 = vector.broadcast %cst_13 : f32 to vector<2x256xf32>
    %25 = arith.divf %23, %24 : vector<2x256xf32>
    %cst_14 = arith.constant dense<0xFF800000> : vector<2x256xf32>
    %26 = vector.multi_reduction <maximumf>, %22, %cst_14 [1] : vector<2x8x256xf32> to vector<2x256xf32>
    %27 = tpu.concatenate %25, %26 in 1 : vector<2x256xf32>, vector<2x256xf32> -> vector<2x512xf32>
    %28 = arith.truncf %27 : vector<2x512xf32> to vector<2x512xbf16>
    %c0_15 = arith.constant 0 : index
    %c0_16 = arith.constant 0 : index
    %29 = vector.load %arg4[%c0_15, %c0_16] : memref<512x256xbf16, #tpu.memory_space<vmem>>, vector<512x256xbf16>
    %cst_17 = arith.constant dense<0.000000e+00> : vector<2x256xf32>
    %30 = tpu.matmul %28, %29, %cst_17 {dimension_numbers = #tpu.dot_dimension_numbers<[1], [0], [0], [1], [0, 0, 1, 1], [], []>} : vector<2x512xbf16>, vector<512x256xbf16>, vector<2x256xf32> -> vector<2x256xf32>
    %31 = arith.negf %30 : vector<2x256xf32>
    %32 = math.exp %31 : vector<2x256xf32>
    %cst_18 = arith.constant 1.000000e+00 : f32
    %33 = vector.broadcast %cst_18 : f32 to vector<2x256xf32>
    %34 = arith.addf %33, %32 : vector<2x256xf32>
    %35 = arith.divf %33, %34 : vector<2x256xf32>
    %36 = vector.shape_cast %35 : vector<2x256xf32> to vector<2x1x256xf32>
    %37 = vector.broadcast %36 : vector<2x1x256xf32> to vector<2x8x256xf32>
    %38 = arith.mulf %22, %37 : vector<2x8x256xf32>
    %c0_19 = arith.constant 0 : index
    %c0_20 = arith.constant 0 : index
    %c0_21 = arith.constant 0 : index
    %39 = vector.load %arg5[%c0_19, %c0_20, %c0_21] : memref<2x8x256xf32, #tpu.memory_space<vmem>>, vector<2x8x256xf32>
    tpu.vector_store %arg5[%c0_19, %c0_20, %c0_21], %38 {strides = array<i32>} : memref<2x8x256xf32, #tpu.memory_space<vmem>>, vector<2x8x256xf32>,
    return
  }
  func.func @transform_0(%arg0: i32) -> (i32, i32, i32) {
    %c0_i32 = arith.constant 0 : i32
    %c0_i32_0 = arith.constant 0 : i32
    %c0_i32_1 = arith.constant 0 : i32
    return %arg0, %c0_i32, %c0_i32_0 : i32, i32, i32
  }
  func.func @transform_1(%arg0: i32) -> (i32, i32) {
    %c0_i32 = arith.constant 0 : i32
    %c0_i32_0 = arith.constant 0 : i32
    %c0_i32_1 = arith.constant 0 : i32
    return %c0_i32, %c0_i32_0 : i32, i32
  }
  func.func @transform_2(%arg0: i32) -> (i32, i32) {
    %c0_i32 = arith.constant 0 : i32
    %c0_i32_0 = arith.constant 0 : i32
    %c0_i32_1 = arith.constant 0 : i32
    return %c0_i32, %c0_i32_0 : i32, i32
  }
  func.func @transform_3(%arg0: i32) -> (i32, i32) {
    %c0_i32 = arith.constant 0 : i32
    %c0_i32_0 = arith.constant 0 : i32
    %c0_i32_1 = arith.constant 0 : i32
    return %c0_i32, %c0_i32_0 : i32, i32
  }
  func.func @transform_4(%arg0: i32) -> (i32, i32, i32) {
    %c0_i32 = arith.constant 0 : i32
    %c0_i32_0 = arith.constant 0 : i32
    %c0_i32_1 = arith.constant 0 : i32
    return %arg0, %c0_i32, %c0_i32_0 : i32, i32, i32
  }
}

</mosaic_0001>

<llo_original>
// kernel: tpu_custom_call.1
$region0: #{tpu_custom_call.1}
  #allocation0 [shape = 'u32[]', space=smem, size = 0x4, offset = 0x4, fixed_abs, tag = 'smem constant byte address 0x4 - core index']
  #allocation1 [shape = 'u32[72,128]{1,0:T(1,128)}', space=vmem, size = 0x9000, scoped, tag = 'internal scratch']
  %s0 = inlined_call_operand.hbm [shape: f32[2,8,256], index: 0, kind: input, shape index: {}]
  %s1 = inlined_call_operand.vmem [shape: f32[2,8], index: 1, kind: input, shape index: {}]
  %s2 = inlined_call_operand.vmem [shape: f32[8,2], index: 2, kind: input, shape index: {}]
  %s3 = inlined_call_operand.hbm [shape: bf16[512,256], index: 3, kind: input, shape index: {}]
  %s4 = inlined_call_operand.hbm [shape: f32[2,8,256], index: 4, kind: output, shape index: {}]
  %s5 = sld [smem:[#allocation0]]
  $region34: #{tpu_custom_call.1} parent=0
    _
  %s7 = ssub.s32 1, %s5
  %s8 = scalar_select 0, %s7, %s5
  $region1: #{tpu_custom_call.1} parent=0
    #allocation2 [shape = 'u8[16384]{0}', space=vmem, size = 0x4000, scoped, tag = 'input window, operand 0, single buffered']
    #allocation3 [shape = 's32[1]{0}', space=sflag, size = 0x4, scoped, tag = 'scoped memory for tpu_custom_call.1']
    #allocation4 [shape = 's32[1]{0}', space=sflag, size = 0x4, scoped, tag = 'scoped memory for tpu_custom_call.1']
    #allocation5 [shape = 'u8[262144]{0}', space=vmem, size = 0x40000, scoped, tag = 'input window, operand 3, single buffered']
    #allocation6 [shape = 's32[1]{0}', space=sflag, size = 0x4, scoped, tag = 'scoped memory for tpu_custom_call.1']
    #allocation7 [shape = 'u8[16384]{0}', space=vmem, size = 0x4000, scoped, tag = 'output window, operand 0, single buffered']
    %9 = vsyncpa [#allocation3], 0
    %10 = vsyncpa [#allocation6], 0
    %11 = vsyncpa [#allocation4], 0
    // Predicated region
    $region2: #{tpu_custom_call.1} parent=1 // pred_check
      _
    $region3: #{tpu_custom_call.1} parent=1 // pred_check_branch
      %13 = sbr.rel (0) target = $region5
    $region4: #{tpu_custom_call.1} parent=1 // pred_region
      %15 = vsyncadd [#allocation3], 0
      %s16 = sshll.u32 %s0, 4
      %s17 = int_to_ptr.hbm [resolvable:$true] %s16
      %s18 = sshll.u32 [#allocation2], 4
      %s19 = int_to_ptr.vmem [resolvable:$true] %s18
      %24 = dma.hbm_to_vmem [thread:$0]  %s17, 512, %s19, [#allocation3], 256, 256, 16
    $region5: #{tpu_custom_call.1} parent=1 // pred_fallthru
      _
    // Predicated region
    $region6: #{tpu_custom_call.1} parent=1 // pred_check
      _
    $region7: #{tpu_custom_call.1} parent=1 // pred_check_branch
      %26 = sbr.rel (0) target = $region9
    $region8: #{tpu_custom_call.1} parent=1 // pred_region
      _
    $region9: #{tpu_custom_call.1} parent=1 // pred_fallthru
      _
    // Predicated region
    $region10: #{tpu_custom_call.1} parent=1 // pred_check
      _
    $region11: #{tpu_custom_call.1} parent=1 // pred_check_branch
      %28 = sbr.rel (0) target = $region13
    $region12: #{tpu_custom_call.1} parent=1 // pred_region
      _
    $region13: #{tpu_custom_call.1} parent=1 // pred_fallthru
      _
    // Predicated region
    $region14: #{tpu_custom_call.1} parent=1 // pred_check
      _
    $region15: #{tpu_custom_call.1} parent=1 // pred_check_branch
      %30 = sbr.rel (0) target = $region17
    $region16: #{tpu_custom_call.1} parent=1 // pred_region
      %32 = vsyncadd [#allocation6], 0
      %s33 = sshll.u32 %s3, 4
      %s34 = int_to_ptr.hbm [resolvable:$true] %s33
      %s35 = sshll.u32 [#allocation5], 4
      %s36 = int_to_ptr.vmem [resolvable:$true] %s35
      %41 = dma.hbm_to_vmem [thread:$0]  %s34, 8192, %s36, [#allocation6], 128, 128, 8
    $region17: #{tpu_custom_call.1} parent=1 // pred_fallthru
      _
    // Predicated region
    $region18: #{tpu_custom_call.1} parent=1 // pred_check
      _
    $region19: #{tpu_custom_call.1} parent=1 // pred_check_branch
      %43 = sbr.rel (0) target = $region21
    $region20: #{tpu_custom_call.1} parent=1 // pred_region
      %45 = dma.done [#allocation3], 512
    $region21: #{tpu_custom_call.1} parent=1 // pred_fallthru
      _
    // Predicated region
    $region22: #{tpu_custom_call.1} parent=1 // pred_check
      _
    $region23: #{tpu_custom_call.1} parent=1 // pred_check_branch
      %47 = sbr.rel (0) target = $region25
    $region24: #{tpu_custom_call.1} parent=1 // pred_region
      %49 = dma.done [#allocation6], 8192
    $region25: #{tpu_custom_call.1} parent=1 // pred_fallthru
      _
    %v50 = vld [vmem:[#allocation2] sm:$0xff]
    %v51 = vld [vmem:[#allocation2 + $0x8] sm:$0xff]
    %v52 = vld [vmem:[#allocation2 + $0x10] sm:$0xff]
    %v53 = vld [vmem:[#allocation2 + $0x18] sm:$0xff]
    %v54 = vld [vmem:[%s1] sm:$0x3]
    %v55 = vld [vmem:[%s2] sm:$0xff]
    %v56 = vadd.f32 %v50, %v51
    %57 = vadd.xlane.f32.xlu0 %v56
    %v58 = vpop.xlane.xlu0 %57
    %v59 = vadd.f32 %v52, %v53
    %60 = vadd.xlane.f32.xlu0 %v59
    %v61 = vpop.xlane.xlu0 %60
    %v62 = vrcp.pop 256.0
    %v63 = vmul.f32 256.0, %v62
    %v64 = vsub.f32 1.0, %v63
    %v65 = vmul.f32 %v62, %v64
    %v66 = vadd.f32 %v62, %v65
    %vm67 = vweird.f32 %v62
    %v68 = vsel %vm67, %v62, %v66
    %v69 = vmul.f32 %v58, %v68
    %v70 = vmul.f32 %v61, %v68
    %v71 = vmax.f32 %v50, %v51
    %72 = vmax.xlane.f32.xlu0 %v71
    %v73 = vpop.xlane.xlu0 %72
    %v74 = vmax.f32 %v52, %v53
    %75 = vmax.xlane.f32.xlu0 %v74
    %v76 = vpop.xlane.xlu0 %75
    %v79 = vlaneseq
    %v80 = vand.u32 %v79, 127
    %v81 = vperm.slane %v69, %v80
    %v82 = vperm.slane %v70, %v80
    %vm83 = vcmask 1041409
    %v84 = vsel %vm83, %v82, %v81
    %v88 = vperm.slane %v73, %v80
    %v89 = vperm.slane %v76, %v80
    %vm90 = vcmask 1043459
    %v91 = vsel %vm90, %v89, %v88
    %vm93 = vcmask 1041408
    %v94 = vsel %vm93, %v84, %v91
    %vm95 = vcmask 64512
    %v97 = vsel %vm95, %v94, 0
    %v100 = vsel %vm95, %v54, 0
    %102 = vmatpush.xpose.msra.mxu0 0.0
    %103 = vmatpush.xpose.msra.mxu0 0.0
    %104 = vmatpush.xpose.msra.mxu0 0.0
    %105 = vmatpush.xpose.msra.mxu0 0.0
    %106 = vmatpush.xpose.msra.mxu0 0.0
    %107 = vmatpush.xpose.msra.mxu0 0.0
    %108 = vmatpush.xpose.msra.mxu0 0.0
    %109 = vmatpush.xpose.msra.mxu0 0.0
    %110 = vmatpush.xpose.msra.mxu0 0.0
    %111 = vmatpush.xpose.msra.mxu0 0.0
    %112 = vmatpush.xpose.msra.mxu0 0.0
    %113 = vmatpush.xpose.msra.mxu0 0.0
    %114 = vmatpush.xpose.msra.mxu0 0.0
    %115 = vmatpush.xpose.msra.mxu0 0.0
    %116 = vmatpush.xpose.msra.mxu0 0.0
    %117 = vmatpush.xpose.msra.mxu0 %v100
    %118 = vmatmul.f32.gmra.mxu0 %v97
    %v119 = vpop.f32.mrf.mxu0
    %v120 = vadd.f32 0.0, %v119
    %121 = vdwg.mxu0
    %v122 = vmax.f32 %v120, 0.0
    %vm123 = vcmask 15360
    %v125 = vsel %vm123, %v122, 0
    %v128 = vsel %vm123, %v55, 0
    %130 = vmatpush.xpose.msra.mxu0 0.0
    %131 = vmatpush.xpose.msra.mxu0 0.0
    %132 = vmatpush.xpose.msra.mxu0 0.0
    %133 = vmatpush.xpose.msra.mxu0 0.0
    %134 = vmatpush.xpose.msra.mxu0 0.0
    %135 = vmatpush.xpose.msra.mxu0 0.0
    %136 = vmatpush.xpose.msra.mxu0 0.0
    %137 = vmatpush.xpose.msra.mxu0 0.0
    %138 = vmatpush.xpose.msra.mxu0 0.0
    %139 = vmatpush.xpose.msra.mxu0 0.0
    %140 = vmatpush.xpose.msra.mxu0 0.0
    %141 = vmatpush.xpose.msra.mxu0 0.0
    %142 = vmatpush.xpose.msra.mxu0 0.0
    %143 = vmatpush.xpose.msra.mxu0 0.0
    %144 = vmatpush.xpose.msra.mxu0 0.0
    %145 = vmatpush.xpose.msra.mxu0 %v128
    %146 = vmatmul.f32.gmra.mxu0 %v125
    %v147 = vpop.f32.mrf.mxu0
    %v148 = vadd.f32 0.0, %v147
    %149 = vdwg.mxu0
    %v151 = vrot.slane %v148, 2
    %v153 = vadd.f32 %v148, %v151
    %v154 = vxor.u32 %v153, 2147483648
    %v155 = vmul.f32 %v154, 1.442695
    %v156 = vpow.pop %v155
    %v157 = vadd.f32 %v156, 1.0
    %v158 = vrcp.pop %v157
    %v159 = vmul.f32 %v157, %v158
    %v160 = vsub.f32 1.0, %v159
    %v161 = vmul.f32 %v158, %v160
    %v162 = vadd.f32 %v158, %v161
    %vm163 = vweird.f32 %v157
    %vm164 = vweird.f32 %v158
    %vm165 = vmor %vm163, %vm164
    %v166 = vsel %vm165, %v158, %v162
    %v167 = vand.u32 2147483647, %v157
    %vm168 = vcmp.eq.f32.partialorder %v167, 8.507059e+37
    %v169 = vand.u32 %v157, 2147483648
    %v170 = vor.u32 1.1754944e-38, %v169
    %v171 = vsel %vm168, %v170, %v166
    %v172 = vmul.f32 1.0, %v171
    %v173 = vperm.slane %v172, 0
    %v174 = vlaneseq
    %v175 = vshrl.u32 %v174, 7
    %177 = vset.pattern.permute.xlu0 %v175
    %178 = vperm.xlu0 %177, %v173
    %v179 = vpop.permute.xlu0 %178
    %v180 = vperm.slane %v172, 1
    %v181 = vlaneseq
    %v182 = vshrl.u32 %v181, 7
    %184 = vset.pattern.permute.xlu0 %v182
    %185 = vperm.xlu0 %184, %v180
    %v186 = vpop.permute.xlu0 %185
    %v187 = vmul.f32 %v50, %v179
    %v188 = vmul.f32 %v51, %v179
    %v189 = vmul.f32 %v52, %v186
    %v190 = vmul.f32 %v53, %v186
    %v191 = vrot.slane %v187, 4
    %v192 = vadd.f32 %v187, %v191
    %v193 = vrot.slane %v192, 2
    %v194 = vadd.f32 %v192, %v193
    %v195 = vrot.slane %v194, 1
    %v196 = vadd.f32 %v194, %v195
    %v197 = vrot.slane %v188, 4
    %v198 = vadd.f32 %v188, %v197
    %v199 = vrot.slane %v198, 2
    %v200 = vadd.f32 %v198, %v199
    %v201 = vrot.slane %v200, 1
    %v202 = vadd.f32 %v200, %v201
    %v203 = vrot.slane %v189, 4
    %v204 = vadd.f32 %v189, %v203
    %v205 = vrot.slane %v204, 2
    %v206 = vadd.f32 %v204, %v205
    %v207 = vrot.slane %v206, 1
    %v208 = vadd.f32 %v206, %v207
    %v209 = vrot.slane %v190, 4
    %v210 = vadd.f32 %v190, %v209
    %v211 = vrot.slane %v210, 2
    %v212 = vadd.f32 %v210, %v211
    %v213 = vrot.slane %v212, 1
    %v214 = vadd.f32 %v212, %v213
    %v215 = vrcp.pop 8.0
    %v216 = vmul.f32 8.0, %v215
    %v217 = vsub.f32 1.0, %v216
    %v218 = vmul.f32 %v215, %v217
    %v219 = vadd.f32 %v215, %v218
    %vm220 = vweird.f32 %v215
    %v221 = vsel %vm220, %v215, %v219
    %v222 = vmul.f32 %v196, %v221
    %v223 = vmul.f32 %v202, %v221
    %v224 = vmul.f32 %v208, %v221
    %v225 = vmul.f32 %v214, %v221
    %v226 = vrot.slane %v187, 4
    %v227 = vmax.f32 %v187, %v226
    %v228 = vrot.slane %v227, 2
    %v229 = vmax.f32 %v227, %v228
    %v230 = vrot.slane %v229, 1
    %v231 = vmax.f32 %v229, %v230
    %v232 = vrot.slane %v188, 4
    %v233 = vmax.f32 %v188, %v232
    %v234 = vrot.slane %v233, 2
    %v235 = vmax.f32 %v233, %v234
    %v236 = vrot.slane %v235, 1
    %v237 = vmax.f32 %v235, %v236
    %v238 = vrot.slane %v189, 4
    %v239 = vmax.f32 %v189, %v238
    %v240 = vrot.slane %v239, 2
    %v241 = vmax.f32 %v239, %v240
    %v242 = vrot.slane %v241, 1
    %v243 = vmax.f32 %v241, %v242
    %v244 = vrot.slane %v190, 4
    %v245 = vmax.f32 %v190, %v244
    %v246 = vrot.slane %v245, 2
    %v247 = vmax.f32 %v245, %v246
    %v248 = vrot.slane %v247, 1
    %v249 = vmax.f32 %v247, %v248
    %v254 = vsel %vm83, %v224, %v222
    %v255 = vsel %vm83, %v225, %v223
    %v262 = vsel %vm83, %v243, %v231
    %v263 = vsel %vm83, %v249, %v237
    %v266 = vpack.c.bf16 %v254, %v254
    %v267 = vpack.c.bf16 %v255, %v255
    %v268 = vpack.c.bf16 %v262, %v262
    %v269 = vpack.c.bf16 %v263, %v263
    %v270 = vld [vmem:[#allocation5] sm:$0xff]
    %v271 = vld [vmem:[#allocation5 + $0x8] sm:$0xff]
    %v272 = vld [vmem:[#allocation5 + $0x10] sm:$0xff]
    %v273 = vld [vmem:[#allocation5 + $0x18] sm:$0xff]
    %v274 = vld [vmem:[#allocation5 + $0x20] sm:$0xff]
    %v275 = vld [vmem:[#allocation5 + $0x28] sm:$0xff]
    %v276 = vld [vmem:[#allocation5 + $0x30] sm:$0xff]
    %v277 = vld [vmem:[#allocation5 + $0x38] sm:$0xff]
    %v278 = vld [vmem:[#allocation5 + $0x40] sm:$0xff]
    %v279 = vld [vmem:[#allocation5 + $0x48] sm:$0xff]
    %v280 = vld [vmem:[#allocation5 + $0x50] sm:$0xff]
    %v281 = vld [vmem:[#allocation5 + $0x58] sm:$0xff]
    %v282 = vld [vmem:[#allocation5 + $0x60] sm:$0xff]
    %v283 = vld [vmem:[#allocation5 + $0x68] sm:$0xff]
    %v284 = vld [vmem:[#allocation5 + $0x70] sm:$0xff]
    %v285 = vld [vmem:[#allocation5 + $0x78] sm:$0xff]
    %v286 = vld [vmem:[#allocation5 + $0x80] sm:$0xff]
    %v287 = vld [vmem:[#allocation5 + $0x88] sm:$0xff]
    %v288 = vld [vmem:[#allocation5 + $0x90] sm:$0xff]
    %v289 = vld [vmem:[#allocation5 + $0x98] sm:$0xff]
    %v290 = vld [vmem:[#allocation5 + $0xa0] sm:$0xff]
    %v291 = vld [vmem:[#allocation5 + $0xa8] sm:$0xff]
    %v292 = vld [vmem:[#allocation5 + $0xb0] sm:$0xff]
    %v293 = vld [vmem:[#allocation5 + $0xb8] sm:$0xff]
    %v294 = vld [vmem:[#allocation5 + $0xc0] sm:$0xff]
    %v295 = vld [vmem:[#allocation5 + $0xc8] sm:$0xff]
    %v296 = vld [vmem:[#allocation5 + $0xd0] sm:$0xff]
    %v297 = vld [vmem:[#allocation5 + $0xd8] sm:$0xff]
    %v298 = vld [vmem:[#allocation5 + $0xe0] sm:$0xff]
    %v299 = vld [vmem:[#allocation5 + $0xe8] sm:$0xff]
    %v300 = vld [vmem:[#allocation5 + $0xf0] sm:$0xff]
    %v301 = vld [vmem:[#allocation5 + $0xf8] sm:$0xff]
    %v302 = vld [vmem:[#allocation5 + $0x100] sm:$0xff]
    %v303 = vld [vmem:[#allocation5 + $0x108] sm:$0xff]
    %v304 = vld [vmem:[#allocation5 + $0x110] sm:$0xff]
    %v305 = vld [vmem:[#allocation5 + $0x118] sm:$0xff]
    %v306 = vld [vmem:[#allocation5 + $0x120] sm:$0xff]
    %v307 = vld [vmem:[#allocation5 + $0x128] sm:$0xff]
    %v308 = vld [vmem:[#allocation5 + $0x130] sm:$0xff]
    %v309 = vld [vmem:[#allocation5 + $0x138] sm:$0xff]
    %v310 = vld [vmem:[#allocation5 + $0x140] sm:$0xff]
    %v311 = vld [vmem:[#allocation5 + $0x148] sm:$0xff]
    %v312 = vld [vmem:[#allocation5 + $0x150] sm:$0xff]
    %v313 = vld [vmem:[#allocation5 + $0x158] sm:$0xff]
    %v314 = vld [vmem:[#allocation5 + $0x160] sm:$0xff]
    %v315 = vld [vmem:[#allocation5 + $0x168] sm:$0xff]
    %v316 = vld [vmem:[#allocation5 + $0x170] sm:$0xff]
    %v317 = vld [vmem:[#allocation5 + $0x178] sm:$0xff]
    %v318 = vld [vmem:[#allocation5 + $0x180] sm:$0xff]
    %v319 = vld [vmem:[#allocation5 + $0x188] sm:$0xff]
    %v320 = vld [vmem:[#allocation5 + $0x190] sm:$0xff]
    %v321 = vld [vmem:[#allocation5 + $0x198] sm:$0xff]
    %v322 = vld [vmem:[#allocation5 + $0x1a0] sm:$0xff]
    %v323 = vld [vmem:[#allocation5 + $0x1a8] sm:$0xff]
    %v324 = vld [vmem:[#allocation5 + $0x1b0] sm:$0xff]
    %v325 = vld [vmem:[#allocation5 + $0x1b8] sm:$0xff]
    %v326 = vld [vmem:[#allocation5 + $0x1c0] sm:$0xff]
    %v327 = vld [vmem:[#allocation5 + $0x1c8] sm:$0xff]
    %v328 = vld [vmem:[#allocation5 + $0x1d0] sm:$0xff]
    %v329 = vld [vmem:[#allocation5 + $0x1d8] sm:$0xff]
    %v330 = vld [vmem:[#allocation5 + $0x1e0] sm:$0xff]
    %v331 = vld [vmem:[#allocation5 + $0x1e8] sm:$0xff]
    %v332 = vld [vmem:[#allocation5 + $0x1f0] sm:$0xff]
    %v333 = vld [vmem:[#allocation5 + $0x1f8] sm:$0xff]
    %v398 = vunpack.c.l.b16 %v270
    %v399 = vunpack.c.h.b16 %v270
    %v400 = vunpack.c.l.b16 %v271
    %v401 = vunpack.c.h.b16 %v271
    %v402 = vunpack.c.l.b16 %v272
    %v403 = vunpack.c.h.b16 %v272
    %v404 = vunpack.c.l.b16 %v273
    %v405 = vunpack.c.h.b16 %v273
    %v406 = vunpack.c.l.b16 %v274
    %v407 = vunpack.c.h.b16 %v274
    %v408 = vunpack.c.l.b16 %v275
    %v409 = vunpack.c.h.b16 %v275
    %v410 = vunpack.c.l.b16 %v276
    %v411 = vunpack.c.h.b16 %v276
    %v412 = vunpack.c.l.b16 %v277
    %v413 = vunpack.c.h.b16 %v277
    %v414 = vunpack.c.l.b16 %v278
    %v415 = vunpack.c.h.b16 %v278
    %v416 = vunpack.c.l.b16 %v279
    %v417 = vunpack.c.h.b16 %v279
    %v418 = vunpack.c.l.b16 %v280
    %v419 = vunpack.c.h.b16 %v280
    %v420 = vunpack.c.l.b16 %v281
    %v421 = vunpack.c.h.b16 %v281
    %v422 = vunpack.c.l.b16 %v282
    %v423 = vunpack.c.h.b16 %v282
    %v424 = vunpack.c.l.b16 %v283
    %v425 = vunpack.c.h.b16 %v283
    %v426 = vunpack.c.l.b16 %v284
    %v427 = vunpack.c.h.b16 %v284
    %v428 = vunpack.c.l.b16 %v285
    %v429 = vunpack.c.h.b16 %v285
    %v430 = vunpack.c.l.b16 %v286
    %v431 = vunpack.c.h.b16 %v286
    %v432 = vunpack.c.l.b16 %v287
    %v433 = vunpack.c.h.b16 %v287
    %v434 = vunpack.c.l.b16 %v288
    %v435 = vunpack.c.h.b16 %v288
    %v436 = vunpack.c.l.b16 %v289
    %v437 = vunpack.c.h.b16 %v289
    %v438 = vunpack.c.l.b16 %v290
    %v439 = vunpack.c.h.b16 %v290
    %v440 = vunpack.c.l.b16 %v291
    %v441 = vunpack.c.h.b16 %v291
    %v442 = vunpack.c.l.b16 %v292
    %v443 = vunpack.c.h.b16 %v292
    %v444 = vunpack.c.l.b16 %v293
    %v445 = vunpack.c.h.b16 %v293
    %v446 = vunpack.c.l.b16 %v294
    %v447 = vunpack.c.h.b16 %v294
    %v448 = vunpack.c.l.b16 %v295
    %v449 = vunpack.c.h.b16 %v295
    %v450 = vunpack.c.l.b16 %v296
    %v451 = vunpack.c.h.b16 %v296
    %v452 = vunpack.c.l.b16 %v297
    %v453 = vunpack.c.h.b16 %v297
    %v454 = vunpack.c.l.b16 %v298
    %v455 = vunpack.c.h.b16 %v298
    %v456 = vunpack.c.l.b16 %v299
    %v457 = vunpack.c.h.b16 %v299
    %v458 = vunpack.c.l.b16 %v300
    %v459 = vunpack.c.h.b16 %v300
    %v460 = vunpack.c.l.b16 %v301
    %v461 = vunpack.c.h.b16 %v301
    %v462 = vunpack.c.l.b16 %v302
    %v463 = vunpack.c.h.b16 %v302
    %v464 = vunpack.c.l.b16 %v303
    %v465 = vunpack.c.h.b16 %v303
    %v466 = vunpack.c.l.b16 %v304
    %v467 = vunpack.c.h.b16 %v304
    %v468 = vunpack.c.l.b16 %v305
    %v469 = vunpack.c.h.b16 %v305
    %v470 = vunpack.c.l.b16 %v306
    %v471 = vunpack.c.h.b16 %v306
    %v472 = vunpack.c.l.b16 %v307
    %v473 = vunpack.c.h.b16 %v307
    %v474 = vunpack.c.l.b16 %v308
    %v475 = vunpack.c.h.b16 %v308
    %v476 = vunpack.c.l.b16 %v309
    %v477 = vunpack.c.h.b16 %v309
    %v478 = vunpack.c.l.b16 %v310
    %v479 = vunpack.c.h.b16 %v310
    %v480 = vunpack.c.l.b16 %v311
    %v481 = vunpack.c.h.b16 %v311
    %v482 = vunpack.c.l.b16 %v312
    %v483 = vunpack.c.h.b16 %v312
    %v484 = vunpack.c.l.b16 %v313
    %v485 = vunpack.c.h.b16 %v313
    %v486 = vunpack.c.l.b16 %v314
    %v487 = vunpack.c.h.b16 %v314
    %v488 = vunpack.c.l.b16 %v315
    %v489 = vunpack.c.h.b16 %v315
    %v490 = vunpack.c.l.b16 %v316
    %v491 = vunpack.c.h.b16 %v316
    %v492 = vunpack.c.l.b16 %v317
    %v493 = vunpack.c.h.b16 %v317
    %v494 = vunpack.c.l.b16 %v318
    %v495 = vunpack.c.h.b16 %v318
    %v496 = vunpack.c.l.b16 %v319
    %v497 = vunpack.c.h.b16 %v319
    %v498 = vunpack.c.l.b16 %v320
    %v499 = vunpack.c.h.b16 %v320
    %v500 = vunpack.c.l.b16 %v321
    %v501 = vunpack.c.h.b16 %v321
    %v502 = vunpack.c.l.b16 %v322
    %v503 = vunpack.c.h.b16 %v322
    %v504 = vunpack.c.l.b16 %v323
    %v505 = vunpack.c.h.b16 %v323
    %v506 = vunpack.c.l.b16 %v324
    %v507 = vunpack.c.h.b16 %v324
    %v508 = vunpack.c.l.b16 %v325
    %v509 = vunpack.c.h.b16 %v325
    %v510 = vunpack.c.l.b16 %v326
    %v511 = vunpack.c.h.b16 %v326
    %v512 = vunpack.c.l.b16 %v327
    %v513 = vunpack.c.h.b16 %v327
    %v514 = vunpack.c.l.b16 %v328
    %v515 = vunpack.c.h.b16 %v328
    %v516 = vunpack.c.l.b16 %v329
    %v517 = vunpack.c.h.b16 %v329
    %v518 = vunpack.c.l.b16 %v330
    %v519 = vunpack.c.h.b16 %v330
    %v520 = vunpack.c.l.b16 %v331
    %v521 = vunpack.c.h.b16 %v331
    %v522 = vunpack.c.l.b16 %v332
    %v523 = vunpack.c.h.b16 %v332
    %v524 = vunpack.c.l.b16 %v333
    %v525 = vunpack.c.h.b16 %v333
    %v526 = vpack.c.b16 %v400, %v398
    %v527 = vpack.c.b16 %v401, %v399
    %v528 = vpack.c.b16 %v404, %v402
    %v529 = vpack.c.b16 %v405, %v403
    %v530 = vpack.c.b16 %v408, %v406
    %v531 = vpack.c.b16 %v409, %v407
    %v532 = vpack.c.b16 %v412, %v410
    %v533 = vpack.c.b16 %v413, %v411
    %v534 = vpack.c.b16 %v416, %v414
    %v535 = vpack.c.b16 %v417, %v415
    %v536 = vpack.c.b16 %v420, %v418
    %v537 = vpack.c.b16 %v421, %v419
    %v538 = vpack.c.b16 %v424, %v422
    %v539 = vpack.c.b16 %v425, %v423
    %v540 = vpack.c.b16 %v428, %v426
    %v541 = vpack.c.b16 %v429, %v427
    %v542 = vpack.c.b16 %v432, %v430
    %v543 = vpack.c.b16 %v433, %v431
    %v544 = vpack.c.b16 %v436, %v434
    %v545 = vpack.c.b16 %v437, %v435
    %v546 = vpack.c.b16 %v440, %v438
    %v547 = vpack.c.b16 %v441, %v439
    %v548 = vpack.c.b16 %v444, %v442
    %v549 = vpack.c.b16 %v445, %v443
    %v550 = vpack.c.b16 %v448, %v446
    %v551 = vpack.c.b16 %v449, %v447
    %v552 = vpack.c.b16 %v452, %v450
    %v553 = vpack.c.b16 %v453, %v451
    %v554 = vpack.c.b16 %v456, %v454
    %v555 = vpack.c.b16 %v457, %v455
    %v556 = vpack.c.b16 %v460, %v458
    %v557 = vpack.c.b16 %v461, %v459
    %v558 = vpack.c.b16 %v464, %v462
    %v559 = vpack.c.b16 %v465, %v463
    %v560 = vpack.c.b16 %v468, %v466
    %v561 = vpack.c.b16 %v469, %v467
    %v562 = vpack.c.b16 %v472, %v470
    %v563 = vpack.c.b16 %v473, %v471
    %v564 = vpack.c.b16 %v476, %v474
    %v565 = vpack.c.b16 %v477, %v475
    %v566 = vpack.c.b16 %v480, %v478
    %v567 = vpack.c.b16 %v481, %v479
    %v568 = vpack.c.b16 %v484, %v482
    %v569 = vpack.c.b16 %v485, %v483
    %v570 = vpack.c.b16 %v488, %v486
    %v571 = vpack.c.b16 %v489, %v487
    %v572 = vpack.c.b16 %v492, %v490
    %v573 = vpack.c.b16 %v493, %v491
    %v574 = vpack.c.b16 %v496, %v494
    %v575 = vpack.c.b16 %v497, %v495
    %v576 = vpack.c.b16 %v500, %v498
    %v577 = vpack.c.b16 %v501, %v499
    %v578 = vpack.c.b16 %v504, %v502
    %v579 = vpack.c.b16 %v505, %v503
    %v580 = vpack.c.b16 %v508, %v506
    %v581 = vpack.c.b16 %v509, %v507
    %v582 = vpack.c.b16 %v512, %v510
    %v583 = vpack.c.b16 %v513, %v511
    %v584 = vpack.c.b16 %v516, %v514
    %v585 = vpack.c.b16 %v517, %v515
    %v586 = vpack.c.b16 %v520, %v518
    %v587 = vpack.c.b16 %v521, %v519
    %v588 = vpack.c.b16 %v524, %v522
    %v589 = vpack.c.b16 %v525, %v523
    %654 = vmatpush.bf16.msra.mxu0 %v540
    %655 = vmatpush.bf16.msra.mxu0 %v538
    %656 = vmatpush.bf16.msra.mxu0 %v536
    %657 = vmatpush.bf16.msra.mxu0 %v534
    %658 = vmatpush.bf16.msra.mxu0 %v532
    %659 = vmatpush.bf16.msra.mxu0 %v530
    %660 = vmatpush.bf16.msra.mxu0 %v528
    %661 = vmatpush.bf16.msra.mxu0 %v526
    %662 = vmatmul.bf16.gmra.mxu0 %v266
    %v663 = vpop.f32.mrf.mxu0
    %v664 = vadd.f32 0.0, %v663
    %v665 = vpop.f32.mrf.mxu0
    %666 = vdwg.mxu0
    %667 = vmatpush.bf16.msra.mxu0 %v556
    %668 = vmatpush.bf16.msra.mxu0 %v554
    %669 = vmatpush.bf16.msra.mxu0 %v552
    %670 = vmatpush.bf16.msra.mxu0 %v550
    %671 = vmatpush.bf16.msra.mxu0 %v548
    %672 = vmatpush.bf16.msra.mxu0 %v546
    %673 = vmatpush.bf16.msra.mxu0 %v544
    %674 = vmatpush.bf16.msra.mxu0 %v542
    %675 = vmatmul.bf16.gmra.mxu0 %v267
    %v676 = vpop.f32.mrf.mxu0
    %v677 = vadd.f32 %v664, %v676
    %v678 = vpop.f32.mrf.mxu0
    %679 = vdwg.mxu0
    %680 = vmatpush.bf16.msra.mxu0 %v572
    %681 = vmatpush.bf16.msra.mxu0 %v570
    %682 = vmatpush.bf16.msra.mxu0 %v568
    %683 = vmatpush.bf16.msra.mxu0 %v566
    %684 = vmatpush.bf16.msra.mxu0 %v564
    %685 = vmatpush.bf16.msra.mxu0 %v562
    %686 = vmatpush.bf16.msra.mxu0 %v560
    %687 = vmatpush.bf16.msra.mxu0 %v558
    %688 = vmatmul.bf16.gmra.mxu0 %v268
    %v689 = vpop.f32.mrf.mxu0
    %v690 = vadd.f32 %v677, %v689
    %v691 = vpop.f32.mrf.mxu0
    %692 = vdwg.mxu0
    %693 = vmatpush.bf16.msra.mxu0 %v588
    %694 = vmatpush.bf16.msra.mxu0 %v586
    %695 = vmatpush.bf16.msra.mxu0 %v584
    %696 = vmatpush.bf16.msra.mxu0 %v582
    %697 = vmatpush.bf16.msra.mxu0 %v580
    %698 = vmatpush.bf16.msra.mxu0 %v578
    %699 = vmatpush.bf16.msra.mxu0 %v576
    %700 = vmatpush.bf16.msra.mxu0 %v574
    %701 = vmatmul.bf16.gmra.mxu0 %v269
    %v702 = vpop.f32.mrf.mxu0
    %v703 = vadd.f32 %v690, %v702
    %v704 = vpop.f32.mrf.mxu0
    %705 = vdwg.mxu0
    %706 = vmatpush.bf16.msra.mxu0 %v541
    %707 = vmatpush.bf16.msra.mxu0 %v539
    %708 = vmatpush.bf16.msra.mxu0 %v537
    %709 = vmatpush.bf16.msra.mxu0 %v535
    %710 = vmatpush.bf16.msra.mxu0 %v533
    %711 = vmatpush.bf16.msra.mxu0 %v531
    %712 = vmatpush.bf16.msra.mxu0 %v529
    %713 = vmatpush.bf16.msra.mxu0 %v527
    %714 = vmatmul.bf16.gmra.mxu0 %v266
    %v715 = vpop.f32.mrf.mxu0
    %v716 = vadd.f32 0.0, %v715
    %v717 = vpop.f32.mrf.mxu0
    %718 = vdwg.mxu0
    %719 = vmatpush.bf16.msra.mxu0 %v557
    %720 = vmatpush.bf16.msra.mxu0 %v555
    %721 = vmatpush.bf16.msra.mxu0 %v553
    %722 = vmatpush.bf16.msra.mxu0 %v551
    %723 = vmatpush.bf16.msra.mxu0 %v549
    %724 = vmatpush.bf16.msra.mxu0 %v547
    %725 = vmatpush.bf16.msra.mxu0 %v545
    %726 = vmatpush.bf16.msra.mxu0 %v543
    %727 = vmatmul.bf16.gmra.mxu0 %v267
    %v728 = vpop.f32.mrf.mxu0
    %v729 = vadd.f32 %v716, %v728
    %v730 = vpop.f32.mrf.mxu0
    %731 = vdwg.mxu0
    %732 = vmatpush.bf16.msra.mxu0 %v573
    %733 = vmatpush.bf16.msra.mxu0 %v571
    %734 = vmatpush.bf16.msra.mxu0 %v569
    %735 = vmatpush.bf16.msra.mxu0 %v567
    %736 = vmatpush.bf16.msra.mxu0 %v565
    %737 = vmatpush.bf16.msra.mxu0 %v563
    %738 = vmatpush.bf16.msra.mxu0 %v561
    %739 = vmatpush.bf16.msra.mxu0 %v559
    %740 = vmatmul.bf16.gmra.mxu0 %v268
    %v741 = vpop.f32.mrf.mxu0
    %v742 = vadd.f32 %v729, %v741
    %v743 = vpop.f32.mrf.mxu0
    %744 = vdwg.mxu0
    %745 = vmatpush.bf16.msra.mxu0 %v589
    %746 = vmatpush.bf16.msra.mxu0 %v587
    %747 = vmatpush.bf16.msra.mxu0 %v585
    %748 = vmatpush.bf16.msra.mxu0 %v583
    %749 = vmatpush.bf16.msra.mxu0 %v581
    %750 = vmatpush.bf16.msra.mxu0 %v579
    %751 = vmatpush.bf16.msra.mxu0 %v577
    %752 = vmatpush.bf16.msra.mxu0 %v575
    %753 = vmatmul.bf16.gmra.mxu0 %v269
    %v754 = vpop.f32.mrf.mxu0
    %v755 = vadd.f32 %v742, %v754
    %v756 = vpop.f32.mrf.mxu0
    %757 = vdwg.mxu0
    %v758 = vxor.u32 %v703, 2147483648
    %v759 = vxor.u32 %v755, 2147483648
    %v760 = vmul.f32 %v758, 1.442695
    %v761 = vpow.pop %v760
    %v762 = vmul.f32 %v759, 1.442695
    %v763 = vpow.pop %v762
    %v764 = vadd.f32 %v761, 1.0
    %v765 = vadd.f32 %v763, 1.0
    %v766 = vrcp.pop %v764
    %v767 = vmul.f32 %v764, %v766
    %v768 = vsub.f32 1.0, %v767
    %v769 = vmul.f32 %v766, %v768
    %v770 = vadd.f32 %v766, %v769
    %vm771 = vweird.f32 %v764
    %vm772 = vweird.f32 %v766
    %vm773 = vmor %vm771, %vm772
    %v774 = vsel %vm773, %v766, %v770
    %v775 = vand.u32 2147483647, %v764
    %vm776 = vcmp.eq.f32.partialorder %v775, 8.507059e+37
    %v777 = vand.u32 %v764, 2147483648
    %v778 = vor.u32 1.1754944e-38, %v777
    %v779 = vsel %vm776, %v778, %v774
    %v780 = vmul.f32 1.0, %v779
    %v781 = vrcp.pop %v765
    %v782 = vmul.f32 %v765, %v781
    %v783 = vsub.f32 1.0, %v782
    %v784 = vmul.f32 %v781, %v783
    %v785 = vadd.f32 %v781, %v784
    %vm786 = vweird.f32 %v765
    %vm787 = vweird.f32 %v781
    %vm788 = vmor %vm786, %vm787
    %v789 = vsel %vm788, %v781, %v785
    %v790 = vand.u32 2147483647, %v765
    %vm791 = vcmp.eq.f32.partialorder %v790, 8.507059e+37
    %v792 = vand.u32 %v765, 2147483648
    %v793 = vor.u32 1.1754944e-38, %v792
    %v794 = vsel %vm791, %v793, %v789
    %v795 = vmul.f32 1.0, %v794
    %v798 = vrot.slane %v795, 7
    %vm799 = vcmask 1040384
    %v800 = vsel %vm799, %v780, %v798
    %v801 = vsel %vm83, %v780, %v798
    %v802 = vrot.slane %v801, 1
    %v803 = vperm.slane %v800, 0
    %v804 = vperm.slane %v800, 1
    %v805 = vperm.slane %v802, 0
    %v806 = vperm.slane %v802, 1
    %v811 = vmul.f32 %v187, %v803
    %v812 = vmul.f32 %v188, %v804
    %v813 = vmul.f32 %v189, %v805
    %v814 = vmul.f32 %v190, %v806
    %815 = vst [vmem:[#allocation7] sm:$0xff] %v811
    %816 = vst [vmem:[#allocation7 + $0x8] sm:$0xff] %v812
    %817 = vst [vmem:[#allocation7 + $0x10] sm:$0xff] %v813
    %818 = vst [vmem:[#allocation7 + $0x18] sm:$0xff] %v814
    // Predicated region
    $region26: #{tpu_custom_call.1} parent=1 // pred_check
      _
    $region27: #{tpu_custom_call.1} parent=1 // pred_check_branch
      %820 = sbr.rel (0) target = $region29
    $region28: #{tpu_custom_call.1} parent=1 // pred_region
      %822 = vsyncadd [#allocation4], 0
      %s823 = sshll.u32 [#allocation7], 4
      %s824 = int_to_ptr.vmem [resolvable:$true] %s823
      %s825 = sshll.u32 %s4, 4
      %s826 = int_to_ptr.hbm [resolvable:$true] %s825
      %831 = dma.vmem_to_hbm [thread:$0]  %s824, 512, %s826, [#allocation4], 256, 256, 16
    $region29: #{tpu_custom_call.1} parent=1 // pred_fallthru
      _
    // Predicated region
    $region30: #{tpu_custom_call.1} parent=1 // pred_check
      _
    $region31: #{tpu_custom_call.1} parent=1 // pred_check_branch
      %833 = sbr.rel (0) target = $region33
    $region32: #{tpu_custom_call.1} parent=1 // pred_region
      %835 = dma.done [#allocation4], 512
    $region33: #{tpu_custom_call.1} parent=1 // pred_fallthru
      _
    %836 = vsyncpa [#allocation3], 1
    %837 = vsyncpa [#allocation6], 1
    %838 = vsyncpa [#allocation4], 1

</llo_original>
